<compile_context>
chip_gen: v6e
topology: v6e:2x2x1
jax: 0.10.0
libtpu: 0.0.40
codegen_flags: <defaults>
</compile_context>

<pallas_src>
import math
from functools import partial

import jax
import jax.numpy as jnp
from jax.experimental import pallas as pl
from jax.experimental.pallas import tpu as pltpu

EPS = 1e-6  # matches nn.LayerNorm(..., eps=1e-06) in the PyTorch module


def _gelu_exact(x):
    # nn.GELU() default = exact erf formulation
    return 0.5 * x * (1.0 + jax.lax.erf(x * 0.7071067811865476))


def _layer_norm(x, gamma, beta):
    mu = jnp.mean(x, axis=-1, keepdims=True)
    var = jnp.mean((x - mu) * (x - mu), axis=-1, keepdims=True)
    return (x - mu) * jax.lax.rsqrt(var + EPS) * gamma + beta


def ffn_kernel(x_ref, w1_ref, b1_ref, g1_ref, be1_ref,
               w2_ref, b2_ref, g2_ref, be2_ref, o_ref):
    # Read the small resident params once per grid step (f32).
    b1, g1, be1 = b1_ref[...], g1_ref[...], be1_ref[...]
    b2, g2, be2 = b2_ref[...], g2_ref[...], be2_ref[...]

    # first_layer: (TM, E) @ (E, 2E) -> f32 accumulation on the MXU
    h = jnp.dot(x_ref[...], w1_ref[...],
                preferred_element_type=jnp.float32) + b1
    h = _layer_norm(h, g1, be1)          # layer_norm1 (f32)
    h = _gelu_exact(h)                   # GELU  (dropout = identity in eval)

    # second_layer: (TM, 2E) @ (2E, E) -> f32 accumulation on the MXU
    y = jnp.dot(h.astype(w2_ref.dtype), w2_ref[...],
                preferred_element_type=jnp.float32) + b2
    y = _layer_norm(y, g2, be2)          # layer_norm2 (f32)
    y = _gelu_exact(y)                   # GELU  (dropout = identity in eval)

    o_ref[...] = y.astype(o_ref.dtype)


def _round_up(x, m):
    return (x + m - 1) // m * m


def _vmem_estimate(tm, E, in_itemsize, out_itemsize):
    """Rough VMEM footprint estimate (bytes) for one pipelined step."""
    H = 2 * E
    weights = 2 * E * H * in_itemsize + 4 * (H + E) * 4      # w1+w2 + bias/ln params
    stream = 2 * tm * E * in_itemsize + 2 * tm * E * out_itemsize  # dbuf x + out
    inter = tm * H * (4 + in_itemsize) + tm * E * 4           # h f32, h cast, y f32
    return weights + stream + inter


def _choose_tm(M, E, in_itemsize, out_itemsize, budget_bytes=20 * (1 << 20)):
    tm = min(512, _round_up(M, 8))
    tm = _round_up(tm, 8)
    while tm > 8 and _vmem_estimate(tm, E, in_itemsize, out_itemsize) > budget_bytes:
        tm //= 2
    return max(tm, 8)


def position_wise_ffn(x, params, matmul_dtype=jnp.bfloat16):
    """x: (batch, seq, E). Returns (batch, seq, E) in x.dtype."""
    B, S, E = x.shape
    H = 2 * E
    M = B * S

    w1, b1, g1, be1, w2, b2, g2, be2 = params

    out_dtype = x.dtype
    in_itemsize = jnp.dtype(matmul_dtype).itemsize
    out_itemsize = jnp.dtype(out_dtype).itemsize

    # --- tiling over the row dimension ---------------------------------
    TM = _choose_tm(M, E, in_itemsize, out_itemsize)
    M_pad = _round_up(M, TM)

    # Pre-cast streamed input and weights to the MXU dtype (halves DMA).
    x2d = x.reshape(M, E).astype(matmul_dtype)
    if M_pad != M:
        x2d = jnp.pad(x2d, ((0, M_pad - M), (0, 0)))
    w1c = w1.astype(matmul_dtype)
    w2c = w2.astype(matmul_dtype)

    grid = (M_pad // TM,)

    # Resident (constant index_map) specs for weights / LN params.
    resident = lambda shape: pl.BlockSpec(shape, lambda i: (0, 0))

    in_specs = [
        pl.BlockSpec((TM, E), lambda i: (i, 0)),   # x tile (streamed)
        resident((E, H)),                          # w1   (resident)
        resident((1, H)),                          # b1
        resident((1, H)),                          # gamma1
        resident((1, H)),                          # beta1
        resident((H, E)),                          # w2   (resident)
        resident((1, E)),                          # b2
        resident((1, E)),                          # gamma2
        resident((1, E)),                          # beta2
    ]
    out_specs = pl.BlockSpec((TM, E), lambda i: (i, 0))

    est = _vmem_estimate(TM, E, in_itemsize, out_itemsize)
    vmem_limit = int(min(max(2 * est, 16 * (1 << 20)), 48 * (1 << 20)))

    cost = pl.CostEstimate(
        flops=4 * M_pad * E * H,                          # two matmuls
        transcendentals=M_pad * (H + E),                  # erf per element
        bytes_accessed=(M_pad * E * in_itemsize           # x in
                        + 2 * E * H * in_itemsize         # w1 + w2
                        + M_pad * E * out_itemsize),      # out
    )

    out2d = pl.pallas_call(
        ffn_kernel,
        out_shape=jax.ShapeDtypeStruct((M_pad, E), out_dtype),
        grid=grid,
        in_specs=in_specs,
        out_specs=out_specs,
        compiler_params=pltpu.CompilerParams(
            dimension_semantics=("parallel",),
            vmem_limit_bytes=vmem_limit,
        ),
        cost_estimate=cost,
    )(x2d, w1c, b1, g1, be1, w2c, b2, g2, be2)

    return out2d[:M].reshape(B, S, E)


def init_params(key, embedding_size):
    """Deterministic init mirroring nn.Linear / nn.LayerNorm shapes."""
    E = embedding_size
    H = 2 * E
    k1, k2, k3, k4 = jax.random.split(key, 4)

    # nn.Linear default init: U(-1/sqrt(fan_in), 1/sqrt(fan_in))
    bound1 = 1.0 / math.sqrt(E)
    w1 = jax.random.uniform(k1, (E, H), jnp.float32, -bound1, bound1)  # (in, out)
    b1 = jax.random.uniform(k2, (1, H), jnp.float32, -bound1, bound1)

    bound2 = 1.0 / math.sqrt(H)
    w2 = jax.random.uniform(k3, (H, E), jnp.float32, -bound2, bound2)
    b2 = jax.random.uniform(k4, (1, E), jnp.float32, -bound2, bound2)

    # LayerNorm: weight=1, bias=0
    g1 = jnp.ones((1, H), jnp.float32)
    be1 = jnp.zeros((1, H), jnp.float32)
    g2 = jnp.ones((1, E), jnp.float32)
    be2 = jnp.zeros((1, E), jnp.float32)

    return (w1, b1, g1, be1, w2, b2, g2, be2)


def ffn_reference_f32(x, params):
    """Pure-f32 JAX reference of the PyTorch forward (dropout in eval)."""
    w1, b1, g1, be1, w2, b2, g2, be2 = params
    h = x @ w1 + b1[0]
    h = _layer_norm(h, g1[0], be1[0])
    h = _gelu_exact(h)
    y = h @ w2 + b2[0]
    y = _layer_norm(y, g2[0], be2[0])
    y = _gelu_exact(y)
    return y


def ffn_reference_matched(x, params, matmul_dtype=jnp.bfloat16):
    """Reference with the same bf16-input / f32-accumulate matmul policy."""
    w1, b1, g1, be1, w2, b2, g2, be2 = params
    h = jnp.dot(x.astype(matmul_dtype), w1.astype(matmul_dtype),
                preferred_element_type=jnp.float32) + b1[0]
    h = _layer_norm(h, g1[0], be1[0])
    h = _gelu_exact(h)
    y = jnp.dot(h.astype(matmul_dtype), w2.astype(matmul_dtype),
                preferred_element_type=jnp.float32) + b2[0]
    y = _layer_norm(y, g2[0], be2[0])
    y = _gelu_exact(y)
    return y


if __name__ == "__main__":
    key = jax.random.PRNGKey(0)
    kx, kp = jax.random.split(key)

    batch, seq, embedding_size = 2, 8, 32
    x = jax.random.normal(kx, (batch, seq, embedding_size), jnp.float32)
    params = init_params(kp, embedding_size)

    out = position_wise_ffn(x, params)
    out = jax.block_until_ready(out)
    assert out.shape == (batch, seq, embedding_size)

    # Tight check vs a reference using the identical matmul precision policy.
    ref_matched = ffn_reference_matched(x, params)
    assert jnp.allclose(out, ref_matched, atol=1e-4, rtol=1e-4), \
        "mismatch vs precision-matched reference"

    # Loose semantic sanity check vs the full-f32 PyTorch-style forward
    # (bf16 matmul inputs introduce small, bounded deviations).
    ref_f32 = ffn_reference_f32(x, params)
    assert jnp.allclose(out, ref_f32, atol=1e-1, rtol=1e-1), \
        "mismatch vs f32 reference (semantics)"

    # TODO(synk): nn.Dropout(0.1) is identity here (eval mode); train-mode RNG
    # masking via pltpu.prng_* is not implemented.
    print("KERNEL_OK")
</pallas_src>

<mosaic_0001>
module attributes {stable_mosaic.version = 11 : i64} {
  func.func @ffn_kernel(%arg0: i32, %arg1: memref<16x32xbf16, #tpu.memory_space<vmem>>, %arg2: memref<32x64xbf16, #tpu.memory_space<vmem>>, %arg3: memref<1x64xf32, #tpu.memory_space<vmem>>, %arg4: memref<1x64xf32, #tpu.memory_space<vmem>>, %arg5: memref<1x64xf32, #tpu.memory_space<vmem>>, %arg6: memref<64x32xbf16, #tpu.memory_space<vmem>>, %arg7: memref<1x32xf32, #tpu.memory_space<vmem>>, %arg8: memref<1x32xf32, #tpu.memory_space<vmem>>, %arg9: memref<1x32xf32, #tpu.memory_space<vmem>>, %arg10: memref<16x32xf32, #tpu.memory_space<vmem>>) attributes {dimension_semantics = [#tpu.dimension_semantics<parallel>], iteration_bounds = array<i64: 1>, scalar_prefetch = 0 : i64, scratch_operands = 0 : i64, tpu.core_type = #tpu.core_type<tc>, window_params = [{transform_indices = @transform_0, window_bounds = array<i64: 16, 32>}, {pipeline_mode = #tpu.pipeline_mode<synchronous>, transform_indices = @transform_1, window_bounds = array<i64: 32, 64>}, {pipeline_mode = #tpu.pipeline_mode<synchronous>, transform_indices = @transform_2, window_bounds = array<i64: 1, 64>}, {pipeline_mode = #tpu.pipeline_mode<synchronous>, transform_indices = @transform_3, window_bounds = array<i64: 1, 64>}, {pipeline_mode = #tpu.pipeline_mode<synchronous>, transform_indices = @transform_4, window_bounds = array<i64: 1, 64>}, {pipeline_mode = #tpu.pipeline_mode<synchronous>, transform_indices = @transform_5, window_bounds = array<i64: 64, 32>}, {pipeline_mode = #tpu.pipeline_mode<synchronous>, transform_indices = @transform_6, window_bounds = array<i64: 1, 32>}, {pipeline_mode = #tpu.pipeline_mode<synchronous>, transform_indices = @transform_7, window_bounds = array<i64: 1, 32>}, {pipeline_mode = #tpu.pipeline_mode<synchronous>, transform_indices = @transform_8, window_bounds = array<i64: 1, 32>}, {transform_indices = @transform_9, window_bounds = array<i64: 16, 32>}]} {
    %c0 = arith.constant 0 : index
    %c0_0 = arith.constant 0 : index
    %0 = vector.load %arg3[%c0, %c0_0] : memref<1x64xf32, #tpu.memory_space<vmem>>, vector<1x64xf32>
    %c0_1 = arith.constant 0 : index
    %c0_2 = arith.constant 0 : index
    %1 = vector.load %arg4[%c0_1, %c0_2] : memref<1x64xf32, #tpu.memory_space<vmem>>, vector<1x64xf32>
    %c0_3 = arith.constant 0 : index
    %c0_4 = arith.constant 0 : index
    %2 = vector.load %arg5[%c0_3, %c0_4] : memref<1x64xf32, #tpu.memory_space<vmem>>, vector<1x64xf32>
    %c0_5 = arith.constant 0 : index
    %c0_6 = arith.constant 0 : index
    %3 = vector.load %arg7[%c0_5, %c0_6] : memref<1x32xf32, #tpu.memory_space<vmem>>, vector<1x32xf32>
    %c0_7 = arith.constant 0 : index
    %c0_8 = arith.constant 0 : index
    %4 = vector.load %arg8[%c0_7, %c0_8] : memref<1x32xf32, #tpu.memory_space<vmem>>, vector<1x32xf32>
    %c0_9 = arith.constant 0 : index
    %c0_10 = arith.constant 0 : index
    %5 = vector.load %arg9[%c0_9, %c0_10] : memref<1x32xf32, #tpu.memory_space<vmem>>, vector<1x32xf32>
    %c0_11 = arith.constant 0 : index
    %c0_12 = arith.constant 0 : index
    %6 = vector.load %arg1[%c0_11, %c0_12] : memref<16x32xbf16, #tpu.memory_space<vmem>>, vector<16x32xbf16>
    %c0_13 = arith.constant 0 : index
    %c0_14 = arith.constant 0 : index
    %7 = vector.load %arg2[%c0_13, %c0_14] : memref<32x64xbf16, #tpu.memory_space<vmem>>, vector<32x64xbf16>
    %cst = arith.constant dense<0.000000e+00> : vector<16x64xf32>
    %8 = tpu.matmul %6, %7, %cst {dimension_numbers = #tpu.dot_dimension_numbers<[1], [0], [0], [1], [0, 0, 1, 1], [], []>} : vector<16x32xbf16>, vector<32x64xbf16>, vector<16x64xf32> -> vector<16x64xf32>
    %9 = vector.broadcast %0 : vector<1x64xf32> to vector<16x64xf32>
    %10 = arith.addf %8, %9 : vector<16x64xf32>
    %cst_15 = arith.constant dense<0.000000e+00> : vector<16xf32>
    %11 = vector.multi_reduction <add>, %10, %cst_15 [1] : vector<16x64xf32> to vector<16xf32>
    %12 = vector.shape_cast %11 : vector<16xf32> to vector<16x1xf32>
    %cst_16 = arith.constant 6.400000e+01 : f32
    %13 = vector.broadcast %cst_16 : f32 to vector<16x1xf32>
    %14 = arith.divf %12, %13 : vector<16x1xf32>
    %15 = vector.broadcast %14 : vector<16x1xf32> to vector<16x64xf32>
    %16 = arith.subf %10, %15 : vector<16x64xf32>
    %17 = vector.broadcast %14 : vector<16x1xf32> to vector<16x64xf32>
    %18 = arith.subf %10, %17 : vector<16x64xf32>
    %19 = arith.mulf %16, %18 : vector<16x64xf32>
    %cst_17 = arith.constant dense<0.000000e+00> : vector<16xf32>
    %20 = vector.multi_reduction <add>, %19, %cst_17 [1] : vector<16x64xf32> to vector<16xf32>
    %21 = vector.shape_cast %20 : vector<16xf32> to vector<16x1xf32>
    %cst_18 = arith.constant 6.400000e+01 : f32
    %22 = vector.broadcast %cst_18 : f32 to vector<16x1xf32>
    %23 = arith.divf %21, %22 : vector<16x1xf32>
    %24 = vector.broadcast %14 : vector<16x1xf32> to vector<16x64xf32>
    %25 = arith.subf %10, %24 : vector<16x64xf32>
    %cst_19 = arith.constant 9.99999997E-7 : f32
    %26 = vector.broadcast %cst_19 : f32 to vector<16x1xf32>
    %27 = arith.addf %23, %26 : vector<16x1xf32>
    %28 = math.rsqrt %27 : vector<16x1xf32>
    %29 = vector.broadcast %28 : vector<16x1xf32> to vector<16x64xf32>
    %30 = arith.mulf %25, %29 : vector<16x64xf32>
    %31 = vector.broadcast %1 : vector<1x64xf32> to vector<16x64xf32>
    %32 = arith.mulf %30, %31 : vector<16x64xf32>
    %33 = vector.broadcast %2 : vector<1x64xf32> to vector<16x64xf32>
    %34 = arith.addf %32, %33 : vector<16x64xf32>
    %cst_20 = arith.constant 5.000000e-01 : f32
    %35 = vector.broadcast %cst_20 : f32 to vector<16x64xf32>
    %36 = arith.mulf %35, %34 : vector<16x64xf32>
    %cst_21 = arith.constant 0.707106769 : f32
    %37 = vector.broadcast %cst_21 : f32 to vector<16x64xf32>
    %38 = arith.mulf %34, %37 : vector<16x64xf32>
    %39 = math.erf %38 : vector<16x64xf32>
    %cst_22 = arith.constant 1.000000e+00 : f32
    %40 = vector.broadcast %cst_22 : f32 to vector<16x64xf32>
    %41 = arith.addf %40, %39 : vector<16x64xf32>
    %42 = arith.mulf %36, %41 : vector<16x64xf32>
    %43 = arith.truncf %42 : vector<16x64xf32> to vector<16x64xbf16>
    %c0_23 = arith.constant 0 : index
    %c0_24 = arith.constant 0 : index
    %44 = vector.load %arg6[%c0_23, %c0_24] : memref<64x32xbf16, #tpu.memory_space<vmem>>, vector<64x32xbf16>
    %cst_25 = arith.constant dense<0.000000e+00> : vector<16x32xf32>
    %45 = tpu.matmul %43, %44, %cst_25 {dimension_numbers = #tpu.dot_dimension_numbers<[1], [0], [0], [1], [0, 0, 1, 1], [], []>} : vector<16x64xbf16>, vector<64x32xbf16>, vector<16x32xf32> -> vector<16x32xf32>
    %46 = vector.broadcast %3 : vector<1x32xf32> to vector<16x32xf32>
    %47 = arith.addf %45, %46 : vector<16x32xf32>
    %cst_26 = arith.constant dense<0.000000e+00> : vector<16xf32>
    %48 = vector.multi_reduction <add>, %47, %cst_26 [1] : vector<16x32xf32> to vector<16xf32>
    %49 = vector.shape_cast %48 : vector<16xf32> to vector<16x1xf32>
    %cst_27 = arith.constant 3.200000e+01 : f32
    %50 = vector.broadcast %cst_27 : f32 to vector<16x1xf32>
    %51 = arith.divf %49, %50 : vector<16x1xf32>
    %52 = vector.broadcast %51 : vector<16x1xf32> to vector<16x32xf32>
    %53 = arith.subf %47, %52 : vector<16x32xf32>
    %54 = vector.broadcast %51 : vector<16x1xf32> to vector<16x32xf32>
    %55 = arith.subf %47, %54 : vector<16x32xf32>
    %56 = arith.mulf %53, %55 : vector<16x32xf32>
    %cst_28 = arith.constant dense<0.000000e+00> : vector<16xf32>
    %57 = vector.multi_reduction <add>, %56, %cst_28 [1] : vector<16x32xf32> to vector<16xf32>
    %58 = vector.shape_cast %57 : vector<16xf32> to vector<16x1xf32>
    %cst_29 = arith.constant 3.200000e+01 : f32
    %59 = vector.broadcast %cst_29 : f32 to vector<16x1xf32>
    %60 = arith.divf %58, %59 : vector<16x1xf32>
    %61 = vector.broadcast %51 : vector<16x1xf32> to vector<16x32xf32>
    %62 = arith.subf %47, %61 : vector<16x32xf32>
    %cst_30 = arith.constant 9.99999997E-7 : f32
    %63 = vector.broadcast %cst_30 : f32 to vector<16x1xf32>
    %64 = arith.addf %60, %63 : vector<16x1xf32>
    %65 = math.rsqrt %64 : vector<16x1xf32>
    %66 = vector.broadcast %65 : vector<16x1xf32> to vector<16x32xf32>
    %67 = arith.mulf %62, %66 : vector<16x32xf32>
    %68 = vector.broadcast %4 : vector<1x32xf32> to vector<16x32xf32>
    %69 = arith.mulf %67, %68 : vector<16x32xf32>
    %70 = vector.broadcast %5 : vector<1x32xf32> to vector<16x32xf32>
    %71 = arith.addf %69, %70 : vector<16x32xf32>
    %cst_31 = arith.constant 5.000000e-01 : f32
    %72 = vector.broadcast %cst_31 : f32 to vector<16x32xf32>
    %73 = arith.mulf %72, %71 : vector<16x32xf32>
    %cst_32 = arith.constant 0.707106769 : f32
    %74 = vector.broadcast %cst_32 : f32 to vector<16x32xf32>
    %75 = arith.mulf %71, %74 : vector<16x32xf32>
    %76 = math.erf %75 : vector<16x32xf32>
    %cst_33 = arith.constant 1.000000e+00 : f32
    %77 = vector.broadcast %cst_33 : f32 to vector<16x32xf32>
    %78 = arith.addf %77, %76 : vector<16x32xf32>
    %79 = arith.mulf %73, %78 : vector<16x32xf32>
    %c0_34 = arith.constant 0 : index
    %c0_35 = arith.constant 0 : index
    %80 = vector.load %arg10[%c0_34, %c0_35] : memref<16x32xf32, #tpu.memory_space<vmem>>, vector<16x32xf32>
    tpu.vector_store %arg10[%c0_34, %c0_35], %79 {strides = array<i32>} : memref<16x32xf32, #tpu.memory_space<vmem>>, vector<16x32xf32>,
    return
  }
  func.func @transform_0(%arg0: i32) -> (i32, i32) {
    %c0_i32 = arith.constant 0 : i32
    %c0_i32_0 = arith.constant 0 : i32
    return %arg0, %c0_i32 : i32, i32
  }
  func.func @transform_1(%arg0: i32) -> (i32, i32) {
    %c0_i32 = arith.constant 0 : i32
    %c0_i32_0 = arith.constant 0 : i32
    %c0_i32_1 = arith.constant 0 : i32
    return %c0_i32, %c0_i32_0 : i32, i32
  }
  func.func @transform_2(%arg0: i32) -> (i32, i32) {
    %c0_i32 = arith.constant 0 : i32
    %c0_i32_0 = arith.constant 0 : i32
    %c0_i32_1 = arith.constant 0 : i32
    return %c0_i32, %c0_i32_0 : i32, i32
  }
  func.func @transform_3(%arg0: i32) -> (i32, i32) {
    %c0_i32 = arith.constant 0 : i32
    %c0_i32_0 = arith.constant 0 : i32
    %c0_i32_1 = arith.constant 0 : i32
    return %c0_i32, %c0_i32_0 : i32, i32
  }
  func.func @transform_4(%arg0: i32) -> (i32, i32) {
    %c0_i32 = arith.constant 0 : i32
    %c0_i32_0 = arith.constant 0 : i32
    %c0_i32_1 = arith.constant 0 : i32
    return %c0_i32, %c0_i32_0 : i32, i32
  }
  func.func @transform_5(%arg0: i32) -> (i32, i32) {
    %c0_i32 = arith.constant 0 : i32
    %c0_i32_0 = arith.constant 0 : i32
    %c0_i32_1 = arith.constant 0 : i32
    return %c0_i32, %c0_i32_0 : i32, i32
  }
  func.func @transform_6(%arg0: i32) -> (i32, i32) {
    %c0_i32 = arith.constant 0 : i32
    %c0_i32_0 = arith.constant 0 : i32
    %c0_i32_1 = arith.constant 0 : i32
    return %c0_i32, %c0_i32_0 : i32, i32
  }
  func.func @transform_7(%arg0: i32) -> (i32, i32) {
    %c0_i32 = arith.constant 0 : i32
    %c0_i32_0 = arith.constant 0 : i32
    %c0_i32_1 = arith.constant 0 : i32
    return %c0_i32, %c0_i32_0 : i32, i32
  }
  func.func @transform_8(%arg0: i32) -> (i32, i32) {
    %c0_i32 = arith.constant 0 : i32
    %c0_i32_0 = arith.constant 0 : i32
    %c0_i32_1 = arith.constant 0 : i32
    return %c0_i32, %c0_i32_0 : i32, i32
  }
  func.func @transform_9(%arg0: i32) -> (i32, i32) {
    %c0_i32 = arith.constant 0 : i32
    %c0_i32_0 = arith.constant 0 : i32
    return %arg0, %c0_i32 : i32, i32
  }
}

</mosaic_0001>

<llo_original>
// kernel: tpu_custom_call.1
$region0: #{tpu_custom_call.1}
  #allocation0 [shape = 'u32[]', space=smem, size = 0x4, offset = 0x4, fixed_abs, tag = 'smem constant byte address 0x4 - core index']
  #allocation1 [shape = 'u32[144,128]{1,0:T(1,128)}', space=vmem, size = 0x12000, scoped, tag = 'internal scratch']
  %s0 = inlined_call_operand.vmem [shape: bf16[16,32], index: 0, kind: input, shape index: {}]
  %s1 = inlined_call_operand.vmem [shape: bf16[32,64], index: 1, kind: input, shape index: {}]
  %s2 = inlined_call_operand.vmem [shape: f32[1,64], index: 2, kind: input, shape index: {}]
  %s3 = inlined_call_operand.vmem [shape: f32[1,64], index: 3, kind: input, shape index: {}]
  %s4 = inlined_call_operand.vmem [shape: f32[1,64], index: 4, kind: input, shape index: {}]
  %s5 = inlined_call_operand.vmem [shape: bf16[64,32], index: 5, kind: input, shape index: {}]
  %s6 = inlined_call_operand.vmem [shape: f32[1,32], index: 6, kind: input, shape index: {}]
  %s7 = inlined_call_operand.vmem [shape: f32[1,32], index: 7, kind: input, shape index: {}]
  %s8 = inlined_call_operand.vmem [shape: f32[1,32], index: 8, kind: input, shape index: {}]
  %s9 = inlined_call_operand.hbm [shape: f32[16,32], index: 9, kind: output, shape index: {}]
  %s10 = sld [smem:[#allocation0]]
  $region46: #{tpu_custom_call.1} parent=0
    _
  %s12 = ssub.s32 1, %s10
  %s13 = scalar_select 0, %s12, %s10
  $region1: #{tpu_custom_call.1} parent=0
    #allocation2 [shape = 'u8[8192]{0}', space=vmem, size = 0x2000, scoped, tag = 'output window, operand 0, single buffered']
    #allocation3 [shape = 's32[1]{0}', space=sflag, size = 0x4, scoped, tag = 'scoped memory for tpu_custom_call.1']
    %14 = vsyncpa [#allocation3], 0
    // Predicated region
    $region2: #{tpu_custom_call.1} parent=1 // pred_check
      _
    $region3: #{tpu_custom_call.1} parent=1 // pred_check_branch
      %16 = sbr.rel (0) target = $region5
    $region4: #{tpu_custom_call.1} parent=1 // pred_region
      _
    $region5: #{tpu_custom_call.1} parent=1 // pred_fallthru
      _
    // Predicated region
    $region6: #{tpu_custom_call.1} parent=1 // pred_check
      _
    $region7: #{tpu_custom_call.1} parent=1 // pred_check_branch
      %18 = sbr.rel (0) target = $region9
    $region8: #{tpu_custom_call.1} parent=1 // pred_region
      _
    $region9: #{tpu_custom_call.1} parent=1 // pred_fallthru
      _
    // Predicated region
    $region10: #{tpu_custom_call.1} parent=1 // pred_check
      _
    $region11: #{tpu_custom_call.1} parent=1 // pred_check_branch
      %20 = sbr.rel (0) target = $region13
    $region12: #{tpu_custom_call.1} parent=1 // pred_region
      _
    $region13: #{tpu_custom_call.1} parent=1 // pred_fallthru
      _
    // Predicated region
    $region14: #{tpu_custom_call.1} parent=1 // pred_check
      _
    $region15: #{tpu_custom_call.1} parent=1 // pred_check_branch
      %22 = sbr.rel (0) target = $region17
    $region16: #{tpu_custom_call.1} parent=1 // pred_region
      _
    $region17: #{tpu_custom_call.1} parent=1 // pred_fallthru
      _
    // Predicated region
    $region18: #{tpu_custom_call.1} parent=1 // pred_check
      _
    $region19: #{tpu_custom_call.1} parent=1 // pred_check_branch
      %24 = sbr.rel (0) target = $region21
    $region20: #{tpu_custom_call.1} parent=1 // pred_region
      _
    $region21: #{tpu_custom_call.1} parent=1 // pred_fallthru
      _
    // Predicated region
    $region22: #{tpu_custom_call.1} parent=1 // pred_check
      _
    $region23: #{tpu_custom_call.1} parent=1 // pred_check_branch
      %26 = sbr.rel (0) target = $region25
    $region24: #{tpu_custom_call.1} parent=1 // pred_region
      _
    $region25: #{tpu_custom_call.1} parent=1 // pred_fallthru
      _
    // Predicated region
    $region26: #{tpu_custom_call.1} parent=1 // pred_check
      _
    $region27: #{tpu_custom_call.1} parent=1 // pred_check_branch
      %28 = sbr.rel (0) target = $region29
    $region28: #{tpu_custom_call.1} parent=1 // pred_region
      _
    $region29: #{tpu_custom_call.1} parent=1 // pred_fallthru
      _
    // Predicated region
    $region30: #{tpu_custom_call.1} parent=1 // pred_check
      _
    $region31: #{tpu_custom_call.1} parent=1 // pred_check_branch
      %30 = sbr.rel (0) target = $region33
    $region32: #{tpu_custom_call.1} parent=1 // pred_region
      _
    $region33: #{tpu_custom_call.1} parent=1 // pred_fallthru
      _
    // Predicated region
    $region34: #{tpu_custom_call.1} parent=1 // pred_check
      _
    $region35: #{tpu_custom_call.1} parent=1 // pred_check_branch
      %32 = sbr.rel (0) target = $region37
    $region36: #{tpu_custom_call.1} parent=1 // pred_region
      _
    $region37: #{tpu_custom_call.1} parent=1 // pred_fallthru
      _
    %v34 = vld [vmem:[%s2] sm:$0x1]
    %v35 = vld [vmem:[%s3] sm:$0x1]
    %v36 = vld [vmem:[%s4] sm:$0x1]
    %v37 = vld [vmem:[%s6] sm:$0x1]
    %v38 = vld [vmem:[%s7] sm:$0x1]
    %v39 = vld [vmem:[%s8] sm:$0x1]
    %v40 = vld [vmem:[%s0] sm:$0xf]
    %v41 = vld [vmem:[%s0 + $0x4] sm:$0xf]
    %v42 = vld [vmem:[%s1] sm:$0xf]
    %v43 = vld [vmem:[%s1 + $0x4] sm:$0xf]
    %v44 = vld [vmem:[%s1 + $0x8] sm:$0xf]
    %v45 = vld [vmem:[%s1 + $0xc] sm:$0xf]
    %v47 = vlaneseq
    %v48 = vshrl.u32 %v47, 7
    %v49 = vsub.s32 0, %v48
    %v50 = vrot.slane %v34, %v49
    %v54 = vunpack.c.l.b16 %v40
    %v55 = vunpack.c.l.b16 %v41
    %v56 = vpack.c.b16 %v55, %v54
    %v61 = vunpack.c.l.b16 %v42
    %v62 = vunpack.c.l.b16 %v43
    %v63 = vunpack.c.l.b16 %v44
    %v64 = vunpack.c.l.b16 %v45
    %v65 = vpack.c.b16 %v62, %v61
    %v66 = vpack.c.b16 %v64, %v63
    %vm69 = vcmask 261120
    %v71 = vsel %vm69, %v56, 0
    %73 = vmatprep.subr.bf16.mxu0 0
    %74 = vmatpush1.bf16.msra.mxu0 0
    %75 = vmatprep.subr.bf16.mxu0 0
    %76 = vmatpush1.bf16.msra.mxu0 0
    %77 = vmatprep.subr.bf16.mxu0 0
    %78 = vmatpush1.bf16.msra.mxu0 0
    %79 = vmatprep.subr.bf16.mxu0 0
    %80 = vmatpush1.bf16.msra.mxu0 0
    %81 = vmatprep.subr.bf16.mxu0 0
    %82 = vmatpush1.bf16.msra.mxu0 0
    %83 = vmatprep.subr.bf16.mxu0 0
    %84 = vmatpush1.bf16.msra.mxu0 0
    %85 = vmatprep.subr.bf16.mxu0 0
    %86 = vmatpush1.bf16.msra.mxu0 %v66
    %87 = vmatprep.subr.bf16.mxu0 0
    %88 = vmatpush1.bf16.msra.mxu0 %v65
    %89 = vmatprep.subr.bf16.mxu0 0
    %90 = vmatpush2.bf16.msra.mxu0 0
    %91 = vmatprep.subr.bf16.mxu0 0
    %92 = vmatpush2.bf16.msra.mxu0 0
    %93 = vmatprep.subr.bf16.mxu0 0
    %94 = vmatpush2.bf16.msra.mxu0 0
    %95 = vmatprep.subr.bf16.mxu0 0
    %96 = vmatpush2.bf16.msra.mxu0 0
    %97 = vmatprep.subr.bf16.mxu0 0
    %98 = vmatpush2.bf16.msra.mxu0 0
    %99 = vmatprep.subr.bf16.mxu0 0
    %100 = vmatpush2.bf16.msra.mxu0 0
    %101 = vmatprep.subr.bf16.mxu0 0
    %102 = vmatpush2.bf16.msra.mxu0 0
    %103 = vmatprep.subr.bf16.mxu0 0
    %104 = vmatpush2.bf16.msra.mxu0 0
    %105 = vmatprep.mubr.bf16.mxu0 0
    %106 = vmatmul.mubr.bf16.gmra.mxu0 %v71
    %v107 = vpop.f32.mrf.mxu0
    %v108 = vadd.f32 %v50, %v107
    %v109 = vpop.f32.mrf.mxu0
    %v110 = vpop.f32.mrf.mxu0
    %v111 = vadd.f32 %v50, %v110
    %v112 = vpop.f32.mrf.mxu0
    %113 = vdwg.mxu0
    %vm114 = vcmask 523264
    %v115 = vsel %vm114, %v108, 0.0
    %116 = vadd.xlane.f32.xlu0 %v115
    %v117 = vpop.xlane.xlu0 %116
    %v118 = vsel %vm114, %v111, 0.0
    %119 = vadd.xlane.f32.xlu0 %v118
    %v120 = vpop.xlane.xlu0 %119
    %v121 = vrcp.pop 64.0
    %v122 = vmul.f32 %v117, %v121
    %v123 = vmul.f32 %v120, %v121
    %v124 = vsub.f32 %v108, %v122
    %v125 = vsub.f32 %v111, %v123
    %v126 = vmul.f32 %v124, %v124
    %v127 = vmul.f32 %v125, %v125
    %v128 = vsel %vm114, %v126, 0.0
    %129 = vadd.xlane.f32.xlu0 %v128
    %v130 = vpop.xlane.xlu0 %129
    %v131 = vsel %vm114, %v127, 0.0
    %132 = vadd.xlane.f32.xlu0 %v131
    %v133 = vpop.xlane.xlu0 %132
    %v134 = vmul.f32 %v130, %v121
    %v135 = vmul.f32 %v133, %v121
    %v136 = vadd.f32 %v134, 1e-06
    %v137 = vadd.f32 %v135, 1e-06
    %v138 = vrsqrt.pop %v136
    %v139 = vrsqrt.pop %v137
    %v140 = vmul.f32 %v124, %v138
    %v141 = vmul.f32 %v125, %v139
    %v143 = vlaneseq
    %v144 = vshrl.u32 %v143, 7
    %v145 = vsub.s32 0, %v144
    %v146 = vrot.slane %v35, %v145
    %v148 = vmul.f32 %v140, %v146
    %v149 = vmul.f32 %v141, %v146
    %v151 = vlaneseq
    %v152 = vshrl.u32 %v151, 7
    %v153 = vsub.s32 0, %v152
    %v154 = vrot.slane %v36, %v153
    %v156 = vadd.f32 %v148, %v154
    %v157 = vadd.f32 %v149, %v154
    %v158 = vmul.f32 %v156, 0.5
    %v159 = vmul.f32 %v157, 0.5
    %v160 = vmul.f32 %v156, 0.70710677
    %v161 = vmul.f32 %v157, 0.70710677
    %v162 = verf.f32.pop %v160
    %v163 = verf.f32.pop %v161
    %v164 = vadd.f32 %v162, 1.0
    %v165 = vadd.f32 %v163, 1.0
    %v166 = vmul.f32 %v158, %v164
    %v167 = vmul.f32 %v159, %v165
    %v168 = vpack.c.bf16 %v167, %v166
    %v169 = vld [vmem:[%s5] sm:$0xf]
    %v170 = vld [vmem:[%s5 + $0x4] sm:$0xf]
    %v171 = vld [vmem:[%s5 + $0x8] sm:$0xf]
    %v172 = vld [vmem:[%s5 + $0xc] sm:$0xf]
    %v173 = vld [vmem:[%s5 + $0x10] sm:$0xf]
    %v174 = vld [vmem:[%s5 + $0x14] sm:$0xf]
    %v175 = vld [vmem:[%s5 + $0x18] sm:$0xf]
    %v176 = vld [vmem:[%s5 + $0x1c] sm:$0xf]
    %v178 = vlaneseq
    %v179 = vshrl.u32 %v178, 7
    %v180 = vsub.s32 0, %v179
    %v181 = vrot.slane %v37, %v180
    %v191 = vunpack.c.l.b16 %v169
    %v192 = vunpack.c.l.b16 %v170
    %v193 = vunpack.c.l.b16 %v171
    %v194 = vunpack.c.l.b16 %v172
    %v195 = vunpack.c.l.b16 %v173
    %v196 = vunpack.c.l.b16 %v174
    %v197 = vunpack.c.l.b16 %v175
    %v198 = vunpack.c.l.b16 %v176
    %v199 = vpack.c.b16 %v192, %v191
    %v200 = vpack.c.b16 %v194, %v193
    %v201 = vpack.c.b16 %v196, %v195
    %v202 = vpack.c.b16 %v198, %v197
    %v208 = vsel %vm114, %v168, 0
    %210 = vmatprep.subr.bf16.mxu0 0
    %211 = vmatpush1.bf16.msra.mxu0 0
    %212 = vmatprep.subr.bf16.mxu0 0
    %213 = vmatpush1.bf16.msra.mxu0 0
    %214 = vmatprep.subr.bf16.mxu0 0
    %215 = vmatpush1.bf16.msra.mxu0 0
    %216 = vmatprep.subr.bf16.mxu0 0
    %217 = vmatpush1.bf16.msra.mxu0 0
    %218 = vmatprep.subr.bf16.mxu0 0
    %219 = vmatpush1.bf16.msra.mxu0 %v202
    %220 = vmatprep.subr.bf16.mxu0 0
    %221 = vmatpush1.bf16.msra.mxu0 %v201
    %222 = vmatprep.subr.bf16.mxu0 0
    %223 = vmatpush1.bf16.msra.mxu0 %v200
    %224 = vmatprep.subr.bf16.mxu0 0
    %225 = vmatpush1.bf16.msra.mxu0 %v199
    %226 = vmatprep.subr.bf16.mxu0 0
    %227 = vmatpush2.bf16.msra.mxu0 0
    %228 = vmatprep.subr.bf16.mxu0 0
    %229 = vmatpush2.bf16.msra.mxu0 0
    %230 = vmatprep.subr.bf16.mxu0 0
    %231 = vmatpush2.bf16.msra.mxu0 0
    %232 = vmatprep.subr.bf16.mxu0 0
    %233 = vmatpush2.bf16.msra.mxu0 0
    %234 = vmatprep.subr.bf16.mxu0 0
    %235 = vmatpush2.bf16.msra.mxu0 0
    %236 = vmatprep.subr.bf16.mxu0 0
    %237 = vmatpush2.bf16.msra.mxu0 0
    %238 = vmatprep.subr.bf16.mxu0 0
    %239 = vmatpush2.bf16.msra.mxu0 0
    %240 = vmatprep.subr.bf16.mxu0 0
    %241 = vmatpush2.bf16.msra.mxu0 0
    %242 = vmatprep.mubr.bf16.mxu0 0
    %243 = vmatmul.mubr.bf16.gmra.mxu0 %v208
    %v244 = vpop.f32.mrf.mxu0
    %v245 = vadd.f32 %v181, %v244
    %v246 = vpop.f32.mrf.mxu0
    %v247 = vpop.f32.mrf.mxu0
    %v248 = vadd.f32 %v181, %v247
    %v249 = vpop.f32.mrf.mxu0
    %250 = vdwg.mxu0
    %v251 = vsel %vm69, %v245, 0.0
    %252 = vadd.xlane.f32.xlu0 %v251
    %v253 = vpop.xlane.xlu0 %252
    %v254 = vsel %vm69, %v248, 0.0
    %255 = vadd.xlane.f32.xlu0 %v254
    %v256 = vpop.xlane.xlu0 %255
    %v257 = vrcp.pop 32.0
    %v258 = vmul.f32 %v253, %v257
    %v259 = vmul.f32 %v256, %v257
    %v260 = vsub.f32 %v245, %v258
    %v261 = vsub.f32 %v248, %v259
    %v262 = vmul.f32 %v260, %v260
    %v263 = vmul.f32 %v261, %v261
    %v264 = vsel %vm69, %v262, 0.0
    %265 = vadd.xlane.f32.xlu0 %v264
    %v266 = vpop.xlane.xlu0 %265
    %v267 = vsel %vm69, %v263, 0.0
    %268 = vadd.xlane.f32.xlu0 %v267
    %v269 = vpop.xlane.xlu0 %268
    %v270 = vmul.f32 %v266, %v257
    %v271 = vmul.f32 %v269, %v257
    %v272 = vadd.f32 %v270, 1e-06
    %v273 = vadd.f32 %v271, 1e-06
    %v274 = vrsqrt.pop %v272
    %v275 = vrsqrt.pop %v273
    %v276 = vmul.f32 %v260, %v274
    %v277 = vmul.f32 %v261, %v275
    %v279 = vlaneseq
    %v280 = vshrl.u32 %v279, 7
    %v281 = vsub.s32 0, %v280
    %v282 = vrot.slane %v38, %v281
    %v284 = vmul.f32 %v276, %v282
    %v285 = vmul.f32 %v277, %v282
    %v287 = vlaneseq
    %v288 = vshrl.u32 %v287, 7
    %v289 = vsub.s32 0, %v288
    %v290 = vrot.slane %v39, %v289
    %v292 = vadd.f32 %v284, %v290
    %v293 = vadd.f32 %v285, %v290
    %v294 = vmul.f32 %v292, 0.5
    %v295 = vmul.f32 %v293, 0.5
    %v296 = vmul.f32 %v292, 0.70710677
    %v297 = vmul.f32 %v293, 0.70710677
    %v298 = verf.f32.pop %v296
    %v299 = verf.f32.pop %v297
    %v300 = vadd.f32 %v298, 1.0
    %v301 = vadd.f32 %v299, 1.0
    %v302 = vmul.f32 %v294, %v300
    %v303 = vmul.f32 %v295, %v301
    %304 = vst.msk [vmem:[#allocation2] sm:$0xff] %vm69, %v302
    %305 = vst.msk [vmem:[#allocation2 + $0x8] sm:$0xff] %vm69, %v303
    // Predicated region
    $region38: #{tpu_custom_call.1} parent=1 // pred_check
      _
    $region39: #{tpu_custom_call.1} parent=1 // pred_check_branch
      %307 = sbr.rel (0) target = $region41
    $region40: #{tpu_custom_call.1} parent=1 // pred_region
      %s309 = ssub.s32 256, 256
      %310 = vsyncadd [#allocation3], %s309
      %s311 = sshll.u32 [#allocation2], 4
      %s312 = int_to_ptr.vmem [resolvable:$true] %s311
      %317 = dma.vmem_to_hbm [thread:$0]  %s312, 256, %s9, [#allocation3], 128, 128, 8
    $region41: #{tpu_custom_call.1} parent=1 // pred_fallthru
      _
    // Predicated region
    $region42: #{tpu_custom_call.1} parent=1 // pred_check
      _
    $region43: #{tpu_custom_call.1} parent=1 // pred_check_branch
      %319 = sbr.rel (0) target = $region45
    $region44: #{tpu_custom_call.1} parent=1 // pred_region
      %320 = dma.done [#allocation3], 256
    $region45: #{tpu_custom_call.1} parent=1 // pred_fallthru
      _
    %321 = vsyncpa [#allocation3], 1

</llo_original>
